<compile_context>
chip_gen: v7x
topology: tpu7x:2x2x1
jax: 0.10.0
libtpu: 0.0.40
codegen_flags: <defaults>
</compile_context>

<pallas_src>
import math

import jax
import jax.numpy as jnp
from jax.experimental import pallas as pl
from jax.experimental.pallas import tpu as pltpu

HIDDEN = 64


def _round_up(n, m):
    return ((n + m - 1) // m) * m


def critic_kernel(x_ref, w1_ref, b1_ref, w2_ref, b2_ref, w3_ref, b3_ref, o_ref):
    """One batch tile of the critic MLP, fully resident in VMEM.

    Layers 1/2 run on the MXU (f32 accumulation); tanh goes to the EUP.
    Layer 3 (64 -> 1) is done as a VPU multiply + XLU lane reduction instead of
    an MXU matmul with N=1, and the scalar bias is folded into the final store.
    """
    x = x_ref[...]
    h1 = jnp.tanh(
        jnp.dot(x, w1_ref[...], preferred_element_type=jnp.float32) + b1_ref[...]
    )
    h2 = jnp.tanh(
        jnp.dot(h1, w2_ref[...], preferred_element_type=jnp.float32) + b2_ref[...]
    )
    o_ref[...] = jnp.sum(h2 * w3_ref[...], axis=-1, keepdims=True) + b3_ref[...]


def critic_forward(x, params, *, block_rows=1024):
    """x: (B, in_dim) float32 -> (B,) float32 value estimates."""
    w1, b1, w2, b2, w3, b3 = params
    B, in_dim = x.shape

    # Batch tile: large tiles amortize the ~0.35 us/step grid overhead; tiny
    # batches collapse to a single tile. Rows padded to an 8-sublane multiple.
    tm = min(block_rows, _round_up(B, 8))
    b_pad = _round_up(B, tm)
    if b_pad != B:
        x = jnp.pad(x, ((0, b_pad - B), (0, 0)))
    grid = (b_pad // tm,)

    flops = 2 * b_pad * (in_dim * HIDDEN + HIDDEN * HIDDEN + HIDDEN)
    bytes_accessed = 4 * (
        b_pad * in_dim                      # x
        + in_dim * HIDDEN + HIDDEN          # w1, b1
        + HIDDEN * HIDDEN + HIDDEN          # w2, b2
        + HIDDEN + 1                        # w3, b3
        + b_pad                             # out
    )

    out = pl.pallas_call(
        critic_kernel,
        out_shape=jax.ShapeDtypeStruct((b_pad, 1), jnp.float32),
        grid=grid,
        in_specs=[
            # x: tiled over batch, auto double-buffered by the pipeline.
            pl.BlockSpec((tm, in_dim), lambda i: (i, 0)),
            # Weights / biases: constant index_map -> fetched once, VMEM-resident.
            pl.BlockSpec((in_dim, HIDDEN), lambda i: (0, 0)),
            pl.BlockSpec((1, HIDDEN), lambda i: (0, 0)),
            pl.BlockSpec((HIDDEN, HIDDEN), lambda i: (0, 0)),
            pl.BlockSpec((1, HIDDEN), lambda i: (0, 0)),
            pl.BlockSpec((1, HIDDEN), lambda i: (0, 0)),   # w3 as a (1, 64) row
            pl.BlockSpec((1, 1), lambda i: (0, 0)),        # b3 scalar
        ],
        out_specs=pl.BlockSpec((tm, 1), lambda i: (i, 0)),
        compiler_params=pltpu.CompilerParams(
            # Independent batch tiles -> shard grid steps across TCs on v7x.
            dimension_semantics=("parallel",),
        ),
        cost_estimate=pl.CostEstimate(
            flops=flops,
            transcendentals=2 * b_pad * HIDDEN,
            bytes_accessed=bytes_accessed,
        ),
    )(x, w1, b1, w2, b2, w3, b3)
    return out[:B, 0]  # drop padding rows + squeeze(-1)


def make_critic_params(key, in_dim):
    """Mirrors orthogonal_init(): gain-scaled orthogonal weights, zero bias.

    Torch stores Linear weights as (out, in); layers 1/2 are transposed to
    (in, out) so the kernel computes x @ W; layer 3 is kept as a (1, 64) row
    for the VPU-mul + lane-reduce path.
    """
    k1, k2, k3 = jax.random.split(key, 3)
    ortho = jax.nn.initializers.orthogonal
    w1 = jnp.transpose(ortho(scale=math.sqrt(2))(k1, (HIDDEN, in_dim), jnp.float32))
    b1 = jnp.zeros((1, HIDDEN), jnp.float32)
    w2 = jnp.transpose(ortho(scale=math.sqrt(2))(k2, (HIDDEN, HIDDEN), jnp.float32))
    b2 = jnp.zeros((1, HIDDEN), jnp.float32)
    w3 = ortho(scale=1.0)(k3, (1, HIDDEN), jnp.float32)   # (out=1, in=64)
    b3 = jnp.zeros((1, 1), jnp.float32)
    return (w1, b1, w2, b2, w3, b3)


def critic_reference(x, params):
    """Pure-JAX reference for correctness check."""
    w1, b1, w2, b2, w3, b3 = params
    h1 = jnp.tanh(x @ w1 + b1)
    h2 = jnp.tanh(h1 @ w2 + b2)
    return (h2 @ w3.T + b3)[:, 0]


if __name__ == "__main__":
    key = jax.random.PRNGKey(0)
    k_params, k_x = jax.random.split(key)

    in_dim = 3    # Pendulum-v1 observation dim
    batch = 20    # not a multiple of 8 -> exercises padding + multi-step grid

    params = make_critic_params(k_params, in_dim)
    x = jax.random.normal(k_x, (batch, in_dim), dtype=jnp.float32)

    ref = critic_reference(x, params)

    # Small block_rows to force several grid steps even at toy batch size.
    values = jax.block_until_ready(critic_forward(x, params, block_rows=8))
    assert values.shape == (batch,)
    assert jnp.allclose(values, ref, atol=1e-5, rtol=1e-5)

    # Default large-tile path (single grid step at this batch size).
    values_default = jax.block_until_ready(critic_forward(x, params))
    assert jnp.allclose(values_default, ref, atol=1e-5, rtol=1e-5)

    print("KERNEL_OK")
</pallas_src>

<mosaic_0001>
module attributes {stable_mosaic.version = 11 : i64} {
  func.func @critic_kernel(%arg0: i32, %arg1: memref<8x3xf32, #tpu.memory_space<vmem>>, %arg2: memref<3x64xf32, #tpu.memory_space<vmem>>, %arg3: memref<1x64xf32, #tpu.memory_space<vmem>>, %arg4: memref<64x64xf32, #tpu.memory_space<vmem>>, %arg5: memref<1x64xf32, #tpu.memory_space<vmem>>, %arg6: memref<1x64xf32, #tpu.memory_space<vmem>>, %arg7: memref<1x1xf32, #tpu.memory_space<vmem>>, %arg8: memref<8x1xf32, #tpu.memory_space<vmem>>) attributes {dimension_semantics = [#tpu.dimension_semantics<parallel>], iteration_bounds = array<i64: 3>, scalar_prefetch = 0 : i64, scratch_operands = 0 : i64, tpu.core_type = #tpu.core_type<tc>, window_params = [{transform_indices = @transform_0, window_bounds = array<i64: 8, 3>}, {pipeline_mode = #tpu.pipeline_mode<synchronous>, transform_indices = @transform_1, window_bounds = array<i64: 3, 64>}, {pipeline_mode = #tpu.pipeline_mode<synchronous>, transform_indices = @transform_2, window_bounds = array<i64: 1, 64>}, {pipeline_mode = #tpu.pipeline_mode<synchronous>, transform_indices = @transform_3, window_bounds = array<i64: 64, 64>}, {pipeline_mode = #tpu.pipeline_mode<synchronous>, transform_indices = @transform_4, window_bounds = array<i64: 1, 64>}, {pipeline_mode = #tpu.pipeline_mode<synchronous>, transform_indices = @transform_5, window_bounds = array<i64: 1, 64>}, {pipeline_mode = #tpu.pipeline_mode<synchronous>, transform_indices = @transform_6, window_bounds = array<i64: 1, 1>}, {transform_indices = @transform_7, window_bounds = array<i64: 8, 1>}]} {
    %c0 = arith.constant 0 : index
    %c0_0 = arith.constant 0 : index
    %0 = vector.load %arg1[%c0, %c0_0] : memref<8x3xf32, #tpu.memory_space<vmem>>, vector<8x3xf32>
    %c0_1 = arith.constant 0 : index
    %c0_2 = arith.constant 0 : index
    %1 = vector.load %arg2[%c0_1, %c0_2] : memref<3x64xf32, #tpu.memory_space<vmem>>, vector<3x64xf32>
    %cst = arith.constant dense<0.000000e+00> : vector<8x64xf32>
    %2 = tpu.matmul %0, %1, %cst {dimension_numbers = #tpu.dot_dimension_numbers<[1], [0], [0], [1], [0, 0, 1, 1], [], []>} : vector<8x3xf32>, vector<3x64xf32>, vector<8x64xf32> -> vector<8x64xf32>
    %c0_3 = arith.constant 0 : index
    %c0_4 = arith.constant 0 : index
    %3 = vector.load %arg3[%c0_3, %c0_4] : memref<1x64xf32, #tpu.memory_space<vmem>>, vector<1x64xf32>
    %4 = vector.broadcast %3 : vector<1x64xf32> to vector<8x64xf32>
    %5 = arith.addf %2, %4 : vector<8x64xf32>
    %6 = math.tanh %5 : vector<8x64xf32>
    %c0_5 = arith.constant 0 : index
    %c0_6 = arith.constant 0 : index
    %7 = vector.load %arg4[%c0_5, %c0_6] : memref<64x64xf32, #tpu.memory_space<vmem>>, vector<64x64xf32>
    %cst_7 = arith.constant dense<0.000000e+00> : vector<8x64xf32>
    %8 = tpu.matmul %6, %7, %cst_7 {dimension_numbers = #tpu.dot_dimension_numbers<[1], [0], [0], [1], [0, 0, 1, 1], [], []>} : vector<8x64xf32>, vector<64x64xf32>, vector<8x64xf32> -> vector<8x64xf32>
    %c0_8 = arith.constant 0 : index
    %c0_9 = arith.constant 0 : index
    %9 = vector.load %arg5[%c0_8, %c0_9] : memref<1x64xf32, #tpu.memory_space<vmem>>, vector<1x64xf32>
    %10 = vector.broadcast %9 : vector<1x64xf32> to vector<8x64xf32>
    %11 = arith.addf %8, %10 : vector<8x64xf32>
    %12 = math.tanh %11 : vector<8x64xf32>
    %c0_10 = arith.constant 0 : index
    %c0_11 = arith.constant 0 : index
    %13 = vector.load %arg6[%c0_10, %c0_11] : memref<1x64xf32, #tpu.memory_space<vmem>>, vector<1x64xf32>
    %14 = vector.broadcast %13 : vector<1x64xf32> to vector<8x64xf32>
    %15 = arith.mulf %12, %14 : vector<8x64xf32>
    %cst_12 = arith.constant dense<0.000000e+00> : vector<8xf32>
    %16 = vector.multi_reduction <add>, %15, %cst_12 [1] : vector<8x64xf32> to vector<8xf32>
    %17 = vector.shape_cast %16 : vector<8xf32> to vector<8x1xf32>
    %c0_13 = arith.constant 0 : index
    %c0_14 = arith.constant 0 : index
    %18 = vector.load %arg7[%c0_13, %c0_14] : memref<1x1xf32, #tpu.memory_space<vmem>>, vector<1x1xf32>
    %19 = vector.broadcast %18 : vector<1x1xf32> to vector<8x1xf32>
    %20 = arith.addf %17, %19 : vector<8x1xf32>
    %c0_15 = arith.constant 0 : index
    %c0_16 = arith.constant 0 : index
    %21 = vector.load %arg8[%c0_15, %c0_16] : memref<8x1xf32, #tpu.memory_space<vmem>>, vector<8x1xf32>
    tpu.vector_store %arg8[%c0_15, %c0_16], %20 {strides = array<i32>} : memref<8x1xf32, #tpu.memory_space<vmem>>, vector<8x1xf32>,
    return
  }
  func.func @transform_0(%arg0: i32) -> (i32, i32) {
    %c0_i32 = arith.constant 0 : i32
    %c0_i32_0 = arith.constant 0 : i32
    return %arg0, %c0_i32 : i32, i32
  }
  func.func @transform_1(%arg0: i32) -> (i32, i32) {
    %c0_i32 = arith.constant 0 : i32
    %c0_i32_0 = arith.constant 0 : i32
    %c0_i32_1 = arith.constant 0 : i32
    return %c0_i32, %c0_i32_0 : i32, i32
  }
  func.func @transform_2(%arg0: i32) -> (i32, i32) {
    %c0_i32 = arith.constant 0 : i32
    %c0_i32_0 = arith.constant 0 : i32
    %c0_i32_1 = arith.constant 0 : i32
    return %c0_i32, %c0_i32_0 : i32, i32
  }
  func.func @transform_3(%arg0: i32) -> (i32, i32) {
    %c0_i32 = arith.constant 0 : i32
    %c0_i32_0 = arith.constant 0 : i32
    %c0_i32_1 = arith.constant 0 : i32
    return %c0_i32, %c0_i32_0 : i32, i32
  }
  func.func @transform_4(%arg0: i32) -> (i32, i32) {
    %c0_i32 = arith.constant 0 : i32
    %c0_i32_0 = arith.constant 0 : i32
    %c0_i32_1 = arith.constant 0 : i32
    return %c0_i32, %c0_i32_0 : i32, i32
  }
  func.func @transform_5(%arg0: i32) -> (i32, i32) {
    %c0_i32 = arith.constant 0 : i32
    %c0_i32_0 = arith.constant 0 : i32
    %c0_i32_1 = arith.constant 0 : i32
    return %c0_i32, %c0_i32_0 : i32, i32
  }
  func.func @transform_6(%arg0: i32) -> (i32, i32) {
    %c0_i32 = arith.constant 0 : i32
    %c0_i32_0 = arith.constant 0 : i32
    %c0_i32_1 = arith.constant 0 : i32
    return %c0_i32, %c0_i32_0 : i32, i32
  }
  func.func @transform_7(%arg0: i32) -> (i32, i32) {
    %c0_i32 = arith.constant 0 : i32
    %c0_i32_0 = arith.constant 0 : i32
    return %arg0, %c0_i32 : i32, i32
  }
}

</mosaic_0001>

<llo_original>
// kernel: tpu_custom_call.1
$region0: #{tpu_custom_call.1}
  #allocation0 [shape = 'u32[]', space=smem, size = 0x4, offset = 0x4, fixed_abs, tag = 'smem constant byte address 0x4 - core index']
  #allocation1 [shape = 'u32[144,128]{1,0:T(1,128)}', space=vmem, size = 0x12000, scoped, tag = 'internal scratch']
  #allocation2 [shape = 'f32[1,1]{1,0:T(1,128)S(1)}', space=vmem, size = 0x200, scoped, tag = 'scoped memory for tpu_custom_call.1']
  %s0 = inlined_call_operand.vmem [shape: f32[24,3], index: 0, kind: input, shape index: {}]
  %s1 = inlined_call_operand.vmem [shape: f32[3,64], index: 1, kind: input, shape index: {}]
  %s2 = inlined_call_operand.vmem [shape: f32[1,64], index: 2, kind: input, shape index: {}]
  %s3 = inlined_call_operand.hbm [shape: f32[64,64], index: 3, kind: input, shape index: {}]
  %s4 = inlined_call_operand.vmem [shape: f32[1,64], index: 4, kind: input, shape index: {}]
  %s5 = inlined_call_operand.vmem [shape: f32[1,64], index: 5, kind: input, shape index: {}]
  %s6 = inlined_call_operand.<no memory space> [shape: f32[1,1], index: 6, kind: input, shape index: {}]
  %s7 = inlined_call_operand.vmem [shape: f32[24,1], index: 7, kind: output, shape index: {}]
  %s8 = sld [smem:[#allocation0]]
  $region65: #{tpu_custom_call.1} parent=0
    _
  %s10 = ssub.s32 1, %s8
  %s11 = scalar_select 0, %s10, %s8
  %v12 = vstv %s6
  %13 = vst [vmem:[#allocation2] sm:$0x1] %v12
  $region1: #{tpu_custom_call.1} parent=0
    #allocation3 [shape = 'u8[32768]{0}', space=vmem, size = 0x8000, scoped, tag = 'input window, operand 3, single buffered']
    #allocation4 [shape = 's32[2]{0}', space=sflag, size = 0x8, scoped, tag = 'scoped memory for tpu_custom_call.1']
    %14 = vsyncpa [#allocation4], 0
    loop: start=0, step=1, limit=5
    $region2: #{tpu_custom_call.1} parent=1 // loop_pre_header
      _
    $region3: #{tpu_custom_call.1} parent=1 // loop_header
      %s16 = sphi 0, %s20
      %p17 = scmp.ge.s32.totalorder %s16, 5
      %s26 = sphi 0, %s28
      %s29 = sphi 0, %s26
      %s30 = sphi 0, %s29
      %s46 = sphi 0, %s30
      %s50 = sphi 0, %s50
      %s52 = sphi 0, %s50
      %s53 = sphi 0, %s52
      %s67 = sphi 0, %s53
      %s71 = sphi 0, %s71
      %s73 = sphi 0, %s71
      %s74 = sphi 0, %s73
      %s88 = sphi 0, %s74
      %s92 = sphi 0, %s92
      %s94 = sphi 0, %s92
      %s95 = sphi 0, %s94
      %s109 = sphi 0, %s95
      %s113 = sphi 0, %s113
      %s115 = sphi 0, %s113
      %s116 = sphi 0, %s115
      %s130 = sphi 0, %s116
      %s134 = sphi 0, %s134
      %s136 = sphi 0, %s134
      %s137 = sphi 0, %s136
      %s151 = sphi 0, %s137
      %s155 = sphi 0, %s155
      %s157 = sphi 0, %s155
      %s158 = sphi 0, %s157
      %s172 = sphi 0, %s158
      %s178 = sphi 0, %s180
      %s181 = sphi 0, %s178
      %s182 = sphi 0, %s181
      %s198 = sphi 0, %s182
    $region4: #{tpu_custom_call.1} parent=1 // loop_header_branch
      %19 = sbr.rel (%p17) target = $region8
    $region5: #{tpu_custom_call.1} parent=1 // loop_body
      %s21 = ssub.s32 %s16, 1
      %s22 = ssub.s32 %s16, 2
      %s23 = sadd.s32 %s16, 1
      %s24 = ssub.s32 %s16, %s23
      %p25 = scmp.eq.s32.totalorder %s24, 0
      %s27 = sadd.s32 %s26, 1
      %s28 = scalar_select %p25, %s26, %s27
      %p31 = pneg %p25
      %p32 = scmp.eq.s32.totalorder %s16, 2
      %p33 = por %p31, %p32
      %p34 = scmp.ne.s32.totalorder %s26, %s29
      %p35 = scmp.eq.s32.totalorder %s16, 0
      %p36 = por %p34, %p35
      %p37 = scmp.ne.s32.totalorder %s26, %s29
      %p38 = scmp.eq.s32.totalorder %s21, 2
      %p39 = por %p37, %p38
      %p40 = scmp.ne.s32.totalorder %s29, %s30
      %p41 = scmp.eq.s32.totalorder %s21, 0
      %p42 = por %p40, %p41
      %p43 = scmp.ne.s32.totalorder %s29, %s30
      %p44 = scmp.eq.s32.totalorder %s22, 2
      %p45 = por %p43, %p44
      %p47 = scmp.ne.s32.totalorder %s30, %s46
      %p48 = scmp.eq.s32.totalorder %s22, 0
      %p49 = por %p47, %p48
      %s51 = sadd.s32 %s50, 1
      %p54 = scmp.eq.s32.totalorder %s16, 2
      %p55 = scmp.ne.s32.totalorder %s50, %s52
      %p56 = scmp.eq.s32.totalorder %s16, 0
      %p57 = por %p55, %p56
      %p58 = scmp.ne.s32.totalorder %s50, %s52
      %p59 = scmp.eq.s32.totalorder %s21, 2
      %p60 = por %p58, %p59
      %p61 = scmp.ne.s32.totalorder %s52, %s53
      %p62 = scmp.eq.s32.totalorder %s21, 0
      %p63 = por %p61, %p62
      %p64 = scmp.ne.s32.totalorder %s52, %s53
      %p65 = scmp.eq.s32.totalorder %s22, 2
      %p66 = por %p64, %p65
      %p68 = scmp.ne.s32.totalorder %s53, %s67
      %p69 = scmp.eq.s32.totalorder %s22, 0
      %p70 = por %p68, %p69
      %s72 = sadd.s32 %s71, 1
      %p75 = scmp.eq.s32.totalorder %s16, 2
      %p76 = scmp.ne.s32.totalorder %s71, %s73
      %p77 = scmp.eq.s32.totalorder %s16, 0
      %p78 = por %p76, %p77
      %p79 = scmp.ne.s32.totalorder %s71, %s73
      %p80 = scmp.eq.s32.totalorder %s21, 2
      %p81 = por %p79, %p80
      %p82 = scmp.ne.s32.totalorder %s73, %s74
      %p83 = scmp.eq.s32.totalorder %s21, 0
      %p84 = por %p82, %p83
      %p85 = scmp.ne.s32.totalorder %s73, %s74
      %p86 = scmp.eq.s32.totalorder %s22, 2
      %p87 = por %p85, %p86
      %p89 = scmp.ne.s32.totalorder %s74, %s88
      %p90 = scmp.eq.s32.totalorder %s22, 0
      %p91 = por %p89, %p90
      %s93 = sadd.s32 %s92, 1
      %p96 = scmp.eq.s32.totalorder %s16, 2
      %p97 = scmp.ne.s32.totalorder %s92, %s94
      %p98 = scmp.eq.s32.totalorder %s16, 0
      %p99 = por %p97, %p98
      %p100 = scmp.ne.s32.totalorder %s92, %s94
      %p101 = scmp.eq.s32.totalorder %s21, 2
      %p102 = por %p100, %p101
      %p103 = scmp.ne.s32.totalorder %s94, %s95
      %p104 = scmp.eq.s32.totalorder %s21, 0
      %p105 = por %p103, %p104
      %p106 = scmp.ne.s32.totalorder %s94, %s95
      %p107 = scmp.eq.s32.totalorder %s22, 2
      %p108 = por %p106, %p107
      %p110 = scmp.ne.s32.totalorder %s95, %s109
      %p111 = scmp.eq.s32.totalorder %s22, 0
      %p112 = por %p110, %p111
      %s114 = sadd.s32 %s113, 1
      %p117 = scmp.eq.s32.totalorder %s16, 2
      %p118 = scmp.ne.s32.totalorder %s113, %s115
      %p119 = scmp.eq.s32.totalorder %s16, 0
      %p120 = por %p118, %p119
      %p121 = scmp.ne.s32.totalorder %s113, %s115
      %p122 = scmp.eq.s32.totalorder %s21, 2
      %p123 = por %p121, %p122
      %p124 = scmp.ne.s32.totalorder %s115, %s116
      %p125 = scmp.eq.s32.totalorder %s21, 0
      %p126 = por %p124, %p125
      %p127 = scmp.ne.s32.totalorder %s115, %s116
      %p128 = scmp.eq.s32.totalorder %s22, 2
      %p129 = por %p127, %p128
      %p131 = scmp.ne.s32.totalorder %s116, %s130
      %p132 = scmp.eq.s32.totalorder %s22, 0
      %p133 = por %p131, %p132
      %s135 = sadd.s32 %s134, 1
      %p138 = scmp.eq.s32.totalorder %s16, 2
      %p139 = scmp.ne.s32.totalorder %s134, %s136
      %p140 = scmp.eq.s32.totalorder %s16, 0
      %p141 = por %p139, %p140
      %p142 = scmp.ne.s32.totalorder %s134, %s136
      %p143 = scmp.eq.s32.totalorder %s21, 2
      %p144 = por %p142, %p143
      %p145 = scmp.ne.s32.totalorder %s136, %s137
      %p146 = scmp.eq.s32.totalorder %s21, 0
      %p147 = por %p145, %p146
      %p148 = scmp.ne.s32.totalorder %s136, %s137
      %p149 = scmp.eq.s32.totalorder %s22, 2
      %p150 = por %p148, %p149
      %p152 = scmp.ne.s32.totalorder %s137, %s151
      %p153 = scmp.eq.s32.totalorder %s22, 0
      %p154 = por %p152, %p153
      %s156 = sadd.s32 %s155, 1
      %p159 = scmp.eq.s32.totalorder %s16, 2
      %p160 = scmp.ne.s32.totalorder %s155, %s157
      %p161 = scmp.eq.s32.totalorder %s16, 0
      %p162 = por %p160, %p161
      %p163 = scmp.ne.s32.totalorder %s155, %s157
      %p164 = scmp.eq.s32.totalorder %s21, 2
      %p165 = por %p163, %p164
      %p166 = scmp.ne.s32.totalorder %s157, %s158
      %p167 = scmp.eq.s32.totalorder %s21, 0
      %p168 = por %p166, %p167
      %p169 = scmp.ne.s32.totalorder %s157, %s158
      %p170 = scmp.eq.s32.totalorder %s22, 2
      %p171 = por %p169, %p170
      %p173 = scmp.ne.s32.totalorder %s158, %s172
      %p174 = scmp.eq.s32.totalorder %s22, 0
      %p175 = por %p173, %p174
      %s176 = ssub.s32 %s16, %s23
      %p177 = scmp.eq.s32.totalorder %s176, 0
      %s179 = sadd.s32 %s178, 1
      %s180 = scalar_select %p177, %s178, %s179
      %p183 = pneg %p177
      %p184 = scmp.eq.s32.totalorder %s16, 2
      %p185 = por %p183, %p184
      %p186 = scmp.ne.s32.totalorder %s178, %s181
      %p187 = scmp.eq.s32.totalorder %s16, 0
      %p188 = por %p186, %p187
      %p189 = scmp.ne.s32.totalorder %s178, %s181
      %p190 = scmp.eq.s32.totalorder %s21, 2
      %p191 = por %p189, %p190
      %p192 = scmp.ne.s32.totalorder %s181, %s182
      %p193 = scmp.eq.s32.totalorder %s21, 0
      %p194 = por %p192, %p193
      %p195 = scmp.ne.s32.totalorder %s181, %s182
      %p196 = scmp.eq.s32.totalorder %s22, 2
      %p197 = por %p195, %p196
      %p199 = scmp.ne.s32.totalorder %s182, %s198
      %p200 = scmp.eq.s32.totalorder %s22, 0
      %p201 = por %p199, %p200
      %p202 = scmp.le.s32.totalorder 1, %s16
      %p203 = scmp.lt.s32.totalorder %s16, 4
      %p204 = pnand %p202, %p203
      %p205 = pneg %p204
      // Predicated region
      $region9: #{tpu_custom_call.1} parent=5 // pred_check
        _
      $region10: #{tpu_custom_call.1} parent=5 // pred_check_branch
        %207 = sbr.rel (%p204) target = $region12
      $region11: #{tpu_custom_call.1} parent=5 // pred_region
        %s208 = ssub.s32 %s16, 1
        // Predicated region
        $region13: #{tpu_custom_call.1} parent=11 // pred_check
          %p209 = pneg %p63
        $region14: #{tpu_custom_call.1} parent=11 // pred_check_branch
          %211 = sbr.rel (%p209) target = $region16
        $region15: #{tpu_custom_call.1} parent=11 // pred_region
          _
        $region16: #{tpu_custom_call.1} parent=11 // pred_fallthru
          _
        // Predicated region
        $region17: #{tpu_custom_call.1} parent=11 // pred_check
          %p212 = pneg %p84
        $region18: #{tpu_custom_call.1} parent=11 // pred_check_branch
          %214 = sbr.rel (%p212) target = $region20
        $region19: #{tpu_custom_call.1} parent=11 // pred_region
          _
        $region20: #{tpu_custom_call.1} parent=11 // pred_fallthru
          _
        // Predicated region
        $region21: #{tpu_custom_call.1} parent=11 // pred_check
          %p215 = pneg %p105
        $region22: #{tpu_custom_call.1} parent=11 // pred_check_branch
          %217 = sbr.rel (%p215) target = $region24
        $region23: #{tpu_custom_call.1} parent=11 // pred_region
          %s219 = ssub.s32 1024, 1024
          %220 = vsyncadd [#allocation4], %s219
          %s221 = sshll.u32 [#allocation3], 4
          %s222 = int_to_ptr.vmem [resolvable:$true] %s221
          %227 = dma.hbm_to_vmem [thread:$0]  %s3, 1024, %s222, [#allocation4], 128, 128, 8
        $region24: #{tpu_custom_call.1} parent=11 // pred_fallthru
          _
        // Predicated region
        $region25: #{tpu_custom_call.1} parent=11 // pred_check
          %p228 = pneg %p126
        $region26: #{tpu_custom_call.1} parent=11 // pred_check_branch
          %230 = sbr.rel (%p228) target = $region28
        $region27: #{tpu_custom_call.1} parent=11 // pred_region
          _
        $region28: #{tpu_custom_call.1} parent=11 // pred_fallthru
          _
        // Predicated region
        $region29: #{tpu_custom_call.1} parent=11 // pred_check
          %p231 = pneg %p147
        $region30: #{tpu_custom_call.1} parent=11 // pred_check_branch
          %233 = sbr.rel (%p231) target = $region32
        $region31: #{tpu_custom_call.1} parent=11 // pred_region
          _
        $region32: #{tpu_custom_call.1} parent=11 // pred_fallthru
          _
        // Predicated region
        $region33: #{tpu_custom_call.1} parent=11 // pred_check
          %p234 = pneg %p168
        $region34: #{tpu_custom_call.1} parent=11 // pred_check_branch
          %236 = sbr.rel (%p234) target = $region36
        $region35: #{tpu_custom_call.1} parent=11 // pred_region
          _
        $region36: #{tpu_custom_call.1} parent=11 // pred_fallthru
          _
      $region12: #{tpu_custom_call.1} parent=5 // pred_fallthru
        _
      %p237 = scmp.lt.s32.totalorder %s16, 3
      // Predicated region
      $region37: #{tpu_custom_call.1} parent=5 // pred_check
        %p238 = pneg %p237
      $region38: #{tpu_custom_call.1} parent=5 // pred_check_branch
        %240 = sbr.rel (%p238) target = $region40
      $region39: #{tpu_custom_call.1} parent=5 // pred_region
        // Predicated region
        $region41: #{tpu_custom_call.1} parent=39 // pred_check
          %p241 = pneg %p36
        $region42: #{tpu_custom_call.1} parent=39 // pred_check_branch
          %243 = sbr.rel (%p241) target = $region44
        $region43: #{tpu_custom_call.1} parent=39 // pred_region
          %p244 = scmp.lt.s32.totalorder %s16, 2
          %s245 = scalar_select %p244, %s16, 2
          %s246 = smul.addr %s245, 8
          %s247 = scalar_lea.vmem %s0, %s246
        $region44: #{tpu_custom_call.1} parent=39 // pred_fallthru
          _
      $region40: #{tpu_custom_call.1} parent=5 // pred_fallthru
        _
      %p248 = scmp.le.s32.totalorder 1, %s16
      %p249 = scmp.lt.s32.totalorder %s16, 4
      %p250 = pnand %p248, %p249
      %p251 = pneg %p250
      // Predicated region
      $region45: #{tpu_custom_call.1} parent=5 // pred_check
        _
      $region46: #{tpu_custom_call.1} parent=5 // pred_check_branch
        %253 = sbr.rel (%p250) target = $region48
      $region47: #{tpu_custom_call.1} parent=5 // pred_region
        %s254 = ssub.s32 %s16, 1
        // Predicated region
        $region49: #{tpu_custom_call.1} parent=47 // pred_check
          %p255 = pneg %p105
        $region50: #{tpu_custom_call.1} parent=47 // pred_check_branch
          %257 = sbr.rel (%p255) target = $region52
        $region51: #{tpu_custom_call.1} parent=47 // pred_region
          %258 = dma.done [#allocation4], 1024
        $region52: #{tpu_custom_call.1} parent=47 // pred_fallthru
          _
        %p259 = scmp.lt.s32.totalorder %s21, 2
        %s260 = scalar_select %p259, %s21, 2
        %s261 = smul.addr %s260, 8
        %s262 = scalar_lea.vmem %s0, %s261
        %p263 = pneg %p42
        %p264 = pneg %p39
        %p265 = pneg %p63
        %p266 = pneg %p60
        %p267 = pneg %p84
        %p268 = pneg %p81
        %p269 = pneg %p105
        %p270 = pneg %p102
        %p271 = pneg %p126
        %p272 = pneg %p123
        %p273 = pneg %p147
        %p274 = pneg %p144
        %p275 = pneg %p168
        %p276 = pneg %p165
        %p277 = pneg %p194
        %p278 = pneg %p191
        %p279 = scmp.lt.s32.totalorder %s21, 2
        %s280 = scalar_select %p279, %s21, 2
        %s281 = smul.addr %s280, 8
        %s282 = scalar_lea.vmem %s7, %s281
        %p283 = scmp.lt.s32.totalorder %s21, 2
        %s284 = scalar_select %p283, %s21, 2
        %s285 = smul.addr %s284, 8
        %s286 = scalar_lea.vmem %s0, %s285
        %p287 = scmp.lt.s32.totalorder %s21, 2
        %s288 = scalar_select %p287, %s21, 2
        %s289 = smul.addr %s288, 8
        %s290 = scalar_lea.vmem %s7, %s289
        %v291 = vld [vmem:[%s286] sm:$0xff]
        %v292 = vld [vmem:[%s1] sm:$0x7]
        %v293 = vld [vmem:[%s2] sm:$0x1]
        %v295 = vlaneseq
        %v296 = vshrl.u32 %v295, 7
        %v297 = vsub.s32 0, %v296
        %v298 = vrot.slane %v293, %v297
        %vm300 = vcmask 23552
        %v302 = vsel %vm300, %v291, 0
        %vm304 = vcmask 1042432
        %v306 = vsel %vm304, %v292, 0
        %308 = vmatprep.subr.mxu0 0.0
        %309 = vmatpush1.msra.mxu0 %v306
        %310 = vmatprep.subr.mxu0 0.0
        %311 = vmatpush1.msra.mxu0 0.0
        %312 = vmatprep.subr.mxu0 0.0
        %313 = vmatpush1.msra.mxu0 0.0
        %314 = vmatprep.subr.mxu0 0.0
        %315 = vmatpush1.msra.mxu0 0.0
        %316 = vmatprep.subr.mxu0 0.0
        %317 = vmatpush1.msra.mxu0 0.0
        %318 = vmatprep.subr.mxu0 0.0
        %319 = vmatpush1.msra.mxu0 0.0
        %320 = vmatprep.subr.mxu0 0.0
        %321 = vmatpush1.msra.mxu0 0.0
        %322 = vmatprep.subr.mxu0 0.0
        %323 = vmatpush1.msra.mxu0 0.0
        %324 = vmatprep.subr.mxu0 0.0
        %325 = vmatpush1.msra.mxu0 0.0
        %326 = vmatprep.subr.mxu0 0.0
        %327 = vmatpush1.msra.mxu0 0.0
        %328 = vmatprep.subr.mxu0 0.0
        %329 = vmatpush1.msra.mxu0 0.0
        %330 = vmatprep.subr.mxu0 0.0
        %331 = vmatpush1.msra.mxu0 0.0
        %332 = vmatprep.subr.mxu0 0.0
        %333 = vmatpush1.msra.mxu0 0.0
        %334 = vmatprep.subr.mxu0 0.0
        %335 = vmatpush1.msra.mxu0 0.0
        %336 = vmatprep.subr.mxu0 0.0
        %337 = vmatpush1.msra.mxu0 0.0
        %338 = vmatprep.subr.mxu0 0.0
        %339 = vmatpush1.msra.mxu0 0.0
        %340 = vmatprep.subr.mxu0 0.0
        %341 = vmatpush1.msra.mxu0 0.0
        %342 = vmatprep.subr.mxu0 0.0
        %343 = vmatpush1.msra.mxu0 0.0
        %344 = vmatprep.subr.mxu0 0.0
        %345 = vmatpush1.msra.mxu0 0.0
        %346 = vmatprep.subr.mxu0 0.0
        %347 = vmatpush1.msra.mxu0 0.0
        %348 = vmatprep.subr.mxu0 0.0
        %349 = vmatpush1.msra.mxu0 0.0
        %350 = vmatprep.subr.mxu0 0.0
        %351 = vmatpush1.msra.mxu0 0.0
        %352 = vmatprep.subr.mxu0 0.0
        %353 = vmatpush1.msra.mxu0 0.0
        %354 = vmatprep.subr.mxu0 0.0
        %355 = vmatpush1.msra.mxu0 0.0
        %356 = vmatprep.subr.mxu0 0.0
        %357 = vmatpush1.msra.mxu0 0.0
        %358 = vmatprep.subr.mxu0 0.0
        %359 = vmatpush1.msra.mxu0 0.0
        %360 = vmatprep.subr.mxu0 0.0
        %361 = vmatpush1.msra.mxu0 0.0
        %362 = vmatprep.subr.mxu0 0.0
        %363 = vmatpush1.msra.mxu0 0.0
        %364 = vmatprep.subr.mxu0 0.0
        %365 = vmatpush1.msra.mxu0 0.0
        %366 = vmatprep.subr.mxu0 0.0
        %367 = vmatpush1.msra.mxu0 0.0
        %368 = vmatprep.subr.mxu0 0.0
        %369 = vmatpush1.msra.mxu0 0.0
        %370 = vmatprep.subr.mxu0 0.0
        %371 = vmatpush1.msra.mxu0 0.0
        %372 = vmatprep.mubr.f32.mxu0 0.0
        %373 = vmatmul.mubr.f32.gmra.mrb[0].mxu0 %v302
        %v374 = vpop.f32.mrb[0].mxu0
        %v375 = vadd.f32 %v298, %v374
        %v376 = vpop.f32.mrb[0].mxu0
        %377 = vdwg.mxu0
        %v378 = vtanh.pop %v375
        %v379 = vld [vmem:[#allocation3] sm:$0xff]
        %v380 = vld [vmem:[#allocation3 + $0x8] sm:$0xff]
        %v381 = vld [vmem:[#allocation3 + $0x10] sm:$0xff]
        %v382 = vld [vmem:[#allocation3 + $0x18] sm:$0xff]
        %v383 = vld [vmem:[#allocation3 + $0x20] sm:$0xff]
        %v384 = vld [vmem:[#allocation3 + $0x28] sm:$0xff]
        %v385 = vld [vmem:[#allocation3 + $0x30] sm:$0xff]
        %v386 = vld [vmem:[#allocation3 + $0x38] sm:$0xff]
        %v387 = vld [vmem:[%s4] sm:$0x1]
        %v389 = vlaneseq
        %v390 = vshrl.u32 %v389, 7
        %v391 = vsub.s32 0, %v390
        %v392 = vrot.slane %v387, %v391
        %vm394 = vcmask 523264
        %v396 = vsel %vm394, %v378, 0
        %398 = vmatprep.subr.mxu0 0.0
        %399 = vmatpush1.msra.mxu0 %v379
        %400 = vmatprep.subr.mxu0 0.0
        %401 = vmatpush1.msra.mxu0 %v380
        %402 = vmatprep.subr.mxu0 0.0
        %403 = vmatpush1.msra.mxu0 %v381
        %404 = vmatprep.subr.mxu0 0.0
        %405 = vmatpush1.msra.mxu0 %v382
        %406 = vmatprep.subr.mxu0 0.0
        %407 = vmatpush1.msra.mxu0 %v383
        %408 = vmatprep.subr.mxu0 0.0
        %409 = vmatpush1.msra.mxu0 %v384
        %410 = vmatprep.subr.mxu0 0.0
        %411 = vmatpush1.msra.mxu0 %v385
        %412 = vmatprep.subr.mxu0 0.0
        %413 = vmatpush1.msra.mxu0 %v386
        %414 = vmatprep.subr.mxu0 0.0
        %415 = vmatpush1.msra.mxu0 0.0
        %416 = vmatprep.subr.mxu0 0.0
        %417 = vmatpush1.msra.mxu0 0.0
        %418 = vmatprep.subr.mxu0 0.0
        %419 = vmatpush1.msra.mxu0 0.0
        %420 = vmatprep.subr.mxu0 0.0
        %421 = vmatpush1.msra.mxu0 0.0
        %422 = vmatprep.subr.mxu0 0.0
        %423 = vmatpush1.msra.mxu0 0.0
        %424 = vmatprep.subr.mxu0 0.0
        %425 = vmatpush1.msra.mxu0 0.0
        %426 = vmatprep.subr.mxu0 0.0
        %427 = vmatpush1.msra.mxu0 0.0
        %428 = vmatprep.subr.mxu0 0.0
        %429 = vmatpush1.msra.mxu0 0.0
        %430 = vmatprep.subr.mxu0 0.0
        %431 = vmatpush1.msra.mxu0 0.0
        %432 = vmatprep.subr.mxu0 0.0
        %433 = vmatpush1.msra.mxu0 0.0
        %434 = vmatprep.subr.mxu0 0.0
        %435 = vmatpush1.msra.mxu0 0.0
        %436 = vmatprep.subr.mxu0 0.0
        %437 = vmatpush1.msra.mxu0 0.0
        %438 = vmatprep.subr.mxu0 0.0
        %439 = vmatpush1.msra.mxu0 0.0
        %440 = vmatprep.subr.mxu0 0.0
        %441 = vmatpush1.msra.mxu0 0.0
        %442 = vmatprep.subr.mxu0 0.0
        %443 = vmatpush1.msra.mxu0 0.0
        %444 = vmatprep.subr.mxu0 0.0
        %445 = vmatpush1.msra.mxu0 0.0
        %446 = vmatprep.subr.mxu0 0.0
        %447 = vmatpush1.msra.mxu0 0.0
        %448 = vmatprep.subr.mxu0 0.0
        %449 = vmatpush1.msra.mxu0 0.0
        %450 = vmatprep.subr.mxu0 0.0
        %451 = vmatpush1.msra.mxu0 0.0
        %452 = vmatprep.subr.mxu0 0.0
        %453 = vmatpush1.msra.mxu0 0.0
        %454 = vmatprep.subr.mxu0 0.0
        %455 = vmatpush1.msra.mxu0 0.0
        %456 = vmatprep.subr.mxu0 0.0
        %457 = vmatpush1.msra.mxu0 0.0
        %458 = vmatprep.subr.mxu0 0.0
        %459 = vmatpush1.msra.mxu0 0.0
        %460 = vmatprep.subr.mxu0 0.0
        %461 = vmatpush1.msra.mxu0 0.0
        %462 = vmatprep.mubr.f32.mxu0 0.0
        %463 = vmatmul.mubr.f32.gmra.mrb[0].mxu0 %v396
        %v464 = vpop.f32.mrb[0].mxu0
        %v465 = vadd.f32 %v392, %v464
        %v466 = vpop.f32.mrb[0].mxu0
        %467 = vdwg.mxu0
        %v468 = vtanh.pop %v465
        %v469 = vld [vmem:[%s5] sm:$0x1]
        %v471 = vlaneseq
        %v472 = vshrl.u32 %v471, 7
        %v473 = vsub.s32 0, %v472
        %v474 = vrot.slane %v469, %v473
        %v476 = vmul.f32 %v468, %v474
        %v477 = vsel %vm394, %v476, 0.0
        %478 = vadd.xlane.f32.xlu0 %v477
        %v479 = vpop.xlane.xlu0 %478
        %v480 = vld [vmem:[#allocation2] sm:$0x1]
        %v482 = vlaneseq
        %v483 = vshrl.u32 %v482, 7
        %v484 = vsub.s32 0, %v483
        %v485 = vrot.slane %v480, %v484
        %v487 = vadd.f32 %v479, %v485
        %vm488 = vcmask 7168
        %489 = vst.msk [vmem:[%s290] sm:$0xff] %vm488, %v487
        %p490 = scmp.lt.s32.totalorder %s21, 2
        %s491 = scalar_select %p490, %s21, 2
        %s492 = smul.addr %s491, 8
        %s493 = scalar_lea.vmem %s7, %s492
        // Predicated region
        $region53: #{tpu_custom_call.1} parent=47 // pred_check
          %p494 = pneg %p191
        $region54: #{tpu_custom_call.1} parent=47 // pred_check_branch
          %496 = sbr.rel (%p494) target = $region56
        $region55: #{tpu_custom_call.1} parent=47 // pred_region
          _
        $region56: #{tpu_custom_call.1} parent=47 // pred_fallthru
          _
      $region48: #{tpu_custom_call.1} parent=5 // pred_fallthru
        _
      %p497 = scmp.le.s32.totalorder 2, %s16
      // Predicated region
      $region57: #{tpu_custom_call.1} parent=5 // pred_check
        %p498 = pneg %p497
      $region58: #{tpu_custom_call.1} parent=5 // pred_check_branch
        %500 = sbr.rel (%p498) target = $region60
      $region59: #{tpu_custom_call.1} parent=5 // pred_region
        %s501 = ssub.s32 %s16, 2
        // Predicated region
        $region61: #{tpu_custom_call.1} parent=59 // pred_check
          %p502 = pneg %p197
        $region62: #{tpu_custom_call.1} parent=59 // pred_check_branch
          %504 = sbr.rel (%p502) target = $region64
        $region63: #{tpu_custom_call.1} parent=59 // pred_region
          %p505 = scmp.lt.s32.totalorder %s22, 2
          %s506 = scalar_select %p505, %s22, 2
          %s507 = smul.addr %s506, 8
          %s508 = scalar_lea.vmem %s7, %s507
        $region64: #{tpu_custom_call.1} parent=59 // pred_fallthru
          _
      $region60: #{tpu_custom_call.1} parent=5 // pred_fallthru
        _
    $region6: #{tpu_custom_call.1} parent=1 // loop_footer
      %s20 = sadd.s32 1, %s16
    $region7: #{tpu_custom_call.1} parent=1 // loop_footer_branch
      %15 = sbr.rel target = $region3
    $region8: #{tpu_custom_call.1} parent=1 // loop_exit
      _
    %509 = vsyncpa [#allocation4], 1
    %s510 = scalar_lea.sflag [#allocation4], 1
    %511 = vsyncpa %s510, 1

</llo_original>
